<compile_context>
chip_gen: v7x
topology: tpu7x:2x2x1
jax: 0.10.0
libtpu: 0.0.40
codegen_flags: <defaults>
</compile_context>

<pallas_src>
import jax
import jax.numpy as jnp
from jax.experimental import pallas as pl
from jax.experimental.pallas import tpu as pltpu


# ---- Config (mirrors SAmodel.Config, small synthetic values) ----
class Config:
    filter_num = 8
    filter_sizes = "2,3,4"
    embedding_dim = 32
    dropout = 0.5


FILTER_SIZES = [int(f) for f in Config.filter_sizes.split(",")]
LANE = 128  # TPU lane width; conv-feature and logit axes are padded to this.


def _round_up(x, m):
    return (x + m - 1) // m * m


# ------------------------------ fused kernel --------------------------------

def fused_textcnn_kernel(emb_ref, wconv_ref, bconv_ref, thresh_ref,
                         wlin_ref, blin_ref, out_ref):
    # emb_ref   : (Bt, T + fsz_max - 1, E)  bf16  zero-padded embeddings
    # wconv_ref : (fsz_max * E, 128)        bf16  stacked, zero-padded conv W
    # bconv_ref : (1, 128)                  f32   stacked conv bias
    # thresh_ref: (1, 128)                  i32   #valid conv positions / column
    # wlin_ref  : (128, 128)                f32   zero-padded linear weight
    # blin_ref  : (1, 128)                  f32   zero-padded linear bias
    # out_ref   : (Bt, 128)                 f32   lane-dense padded logits
    Bt, L_in, E = emb_ref.shape
    KW, NF = wconv_ref.shape
    fsz_max = KW // E
    T = L_in - fsz_max + 1                  # conv positions (multiple of 8)

    emb = emb_ref[...]
    # im2col: window offset s occupies lanes [s*E, (s+1)*E).
    patches = jnp.concatenate(
        [emb[:, s:s + T, :] for s in range(fsz_max)], axis=-1)   # (Bt, T, KW)
    patches = patches.reshape(Bt * T, KW)                        # layout-free

    # One MXU matmul for all filter sizes (bf16 in, f32 accumulate).
    conv = jnp.dot(patches, wconv_ref[...],
                   preferred_element_type=jnp.float32)           # (Bt*T, NF)
    conv = jnp.maximum(conv + bconv_ref[...], 0.0)               # bias + ReLU
    conv = conv.reshape(Bt, T, NF)

    # Mask positions past each filter's valid range (exact after ReLU).
    t_idx = jax.lax.broadcasted_iota(jnp.int32, (Bt, T, NF), 1)
    conv = jnp.where(t_idx < thresh_ref[...][None, :, :], conv, 0.0)

    pooled = jnp.max(conv, axis=1)                               # (Bt, NF)

    # Final linear on the padded (128, 128) weight -> lane-dense store.
    logits = jnp.dot(pooled, wlin_ref[...],
                     preferred_element_type=jnp.float32) + blin_ref[...]
    out_ref[...] = logits


def fused_textcnn(emb, wconv, bconv, thresh, wlin, blin, *, block_b):
    B_pad, L_in, E = emb.shape
    KW, NF = wconv.shape
    _, TAGP = wlin.shape
    grid = (B_pad // block_b,)
    return pl.pallas_call(
        fused_textcnn_kernel,
        out_shape=jax.ShapeDtypeStruct((B_pad, TAGP), jnp.float32),
        grid=grid,
        in_specs=[
            pl.BlockSpec((block_b, L_in, E), lambda i: (i, 0, 0)),
            pl.BlockSpec((KW, NF), lambda i: (0, 0)),
            pl.BlockSpec((1, NF), lambda i: (0, 0)),
            pl.BlockSpec((1, NF), lambda i: (0, 0)),
            pl.BlockSpec((NF, TAGP), lambda i: (0, 0)),
            pl.BlockSpec((1, TAGP), lambda i: (0, 0)),
        ],
        out_specs=pl.BlockSpec((block_b, TAGP), lambda i: (i, 0)),
        compiler_params=pltpu.CompilerParams(
            dimension_semantics=("parallel",),
            vmem_limit_bytes=32 * 1024 * 1024,
        ),
    )(emb, wconv, bconv, thresh, wlin, blin)


# --------------------------- model glue / forward ---------------------------

def init_params(key, vocab_size, tag_size):
    keys = jax.random.split(key, 2 + 2 * len(FILTER_SIZES) + 2)
    E, F = Config.embedding_dim, Config.filter_num
    params = {"embedding": 0.1 * jax.random.normal(keys[0], (vocab_size, E),
                                                   jnp.float32)}
    for i, fsz in enumerate(FILTER_SIZES):
        params[f"conv{i}_w"] = 0.1 * jax.random.normal(
            keys[1 + 2 * i], (fsz, E, F), jnp.float32)
        params[f"conv{i}_b"] = 0.1 * jax.random.normal(
            keys[2 + 2 * i], (1, F), jnp.float32)
    K = len(FILTER_SIZES) * F
    params["linear_w"] = 0.1 * jax.random.normal(
        keys[-2], (K, tag_size), jnp.float32)
    params["linear_b"] = 0.1 * jax.random.normal(
        keys[-1], (1, tag_size), jnp.float32)
    return params


def textcnn_forward(params, x_ids):
    B, L = x_ids.shape
    E = Config.embedding_dim
    F = Config.filter_num
    fsz_max = max(FILTER_SIZES)
    assert L >= fsz_max, "sequence shorter than the largest conv filter"
    n_feat = len(FILTER_SIZES) * F
    tag_size = params["linear_w"].shape[1]
    assert n_feat <= LANE and tag_size <= LANE

    # Embedding gather (plain XLA gather feeding the fused kernel in bf16).
    # TODO(synk): gather could be fused via scalar prefetch + pl.Element row
    # indexing; kept in XLA here.
    emb = jnp.take(params["embedding"], x_ids, axis=0).astype(jnp.bfloat16)

    # Batch tiling: Bt multiple of 8 (sublanes), capped at 128 so the matmul M
    # dim (Bt*T) feeds the MXU; batch grid axis is "parallel".
    block_b = min(128, _round_up(B, 8))
    B_pad = _round_up(B, block_b)
    # Conv positions per row: multiple of 8 so in-kernel reshapes are
    # layout-free; extra positions are masked out via `thresh`.
    T = _round_up(L, 8)
    L_in = T + fsz_max - 1
    emb = jnp.pad(emb, ((0, B_pad - B), (0, L_in - L), (0, 0)))

    # Stack all filter banks into one lane-dense (fsz_max*E, 128) weight.
    wconv = jnp.zeros((fsz_max * E, LANE), jnp.float32)
    bconv = jnp.zeros((1, LANE), jnp.float32)
    thresh = jnp.zeros((1, LANE), jnp.int32)
    for i, fsz in enumerate(FILTER_SIZES):
        w = params[f"conv{i}_w"].reshape(fsz * E, F)
        wconv = wconv.at[:fsz * E, i * F:(i + 1) * F].set(w)
        bconv = bconv.at[:, i * F:(i + 1) * F].set(params[f"conv{i}_b"])
        thresh = thresh.at[:, i * F:(i + 1) * F].set(L - fsz + 1)
    wlin = jnp.zeros((LANE, LANE), jnp.float32)
    wlin = wlin.at[:n_feat, :tag_size].set(params["linear_w"])
    blin = jnp.zeros((1, LANE), jnp.float32)
    blin = blin.at[:, :tag_size].set(params["linear_b"])

    out = fused_textcnn(emb, wconv.astype(jnp.bfloat16), bconv, thresh,
                        wlin, blin, block_b=block_b)
    # TODO(synk): dropout is identity in eval/inference mode; training-mode
    # random masking is not implemented.
    return out[:B, :tag_size]


def textcnn_reference(params, x_ids):
    """Pure-JAX f32 reference of the PyTorch forward (eval mode)."""
    emb = jnp.take(params["embedding"], x_ids, axis=0)      # (B, L, E)
    L = emb.shape[1]
    feats = []
    for i, fsz in enumerate(FILTER_SIZES):
        w = params[f"conv{i}_w"]                             # (fsz, E, F)
        b = params[f"conv{i}_b"]                             # (1, F)
        Tv = L - fsz + 1
        conv = sum(jnp.einsum("ble,ef->blf", emb[:, s:s + Tv, :], w[s])
                   for s in range(fsz)) + b[None, :, :]
        feats.append(jnp.max(jnp.maximum(conv, 0.0), axis=1))
    h = jnp.concatenate(feats, axis=1)
    return h @ params["linear_w"] + params["linear_b"]


if __name__ == "__main__":
    vocab_size, tag_size = 50, 5
    B, L = 2, 16
    key = jax.random.PRNGKey(0)
    k_params, k_x = jax.random.split(key)
    params = init_params(k_params, vocab_size, tag_size)
    x_ids = jax.random.randint(k_x, (B, L), 0, vocab_size, dtype=jnp.int32)

    logits = textcnn_forward(params, x_ids)
    jax.block_until_ready(logits)
    assert logits.shape == (B, tag_size), logits.shape

    ref = textcnn_reference(params, x_ids)
    assert jnp.allclose(logits, ref, atol=1e-2, rtol=1e-2), (
        jnp.max(jnp.abs(logits - ref)))
    print("KERNEL_OK")
</pallas_src>

<mosaic_0001>
module attributes {stable_mosaic.version = 11 : i64} {
  func.func @fused_textcnn_kernel(%arg0: i32, %arg1: memref<8x19x32xbf16, #tpu.memory_space<vmem>>, %arg2: memref<128x128xbf16, #tpu.memory_space<vmem>>, %arg3: memref<1x128xf32, #tpu.memory_space<vmem>>, %arg4: memref<1x128xi32, #tpu.memory_space<vmem>>, %arg5: memref<128x128xf32, #tpu.memory_space<vmem>>, %arg6: memref<1x128xf32, #tpu.memory_space<vmem>>, %arg7: memref<8x128xf32, #tpu.memory_space<vmem>>) attributes {dimension_semantics = [#tpu.dimension_semantics<parallel>], iteration_bounds = array<i64: 1>, scalar_prefetch = 0 : i64, scratch_operands = 0 : i64, tpu.core_type = #tpu.core_type<tc>, window_params = [{transform_indices = @transform_0, window_bounds = array<i64: 8, 19, 32>}, {pipeline_mode = #tpu.pipeline_mode<synchronous>, transform_indices = @transform_1, window_bounds = array<i64: 128, 128>}, {pipeline_mode = #tpu.pipeline_mode<synchronous>, transform_indices = @transform_2, window_bounds = array<i64: 1, 128>}, {pipeline_mode = #tpu.pipeline_mode<synchronous>, transform_indices = @transform_3, window_bounds = array<i64: 1, 128>}, {pipeline_mode = #tpu.pipeline_mode<synchronous>, transform_indices = @transform_4, window_bounds = array<i64: 128, 128>}, {pipeline_mode = #tpu.pipeline_mode<synchronous>, transform_indices = @transform_5, window_bounds = array<i64: 1, 128>}, {transform_indices = @transform_6, window_bounds = array<i64: 8, 128>}]} {
    %c0 = arith.constant 0 : index
    %c0_0 = arith.constant 0 : index
    %c0_1 = arith.constant 0 : index
    %0 = vector.load %arg1[%c0, %c0_0, %c0_1] : memref<8x19x32xbf16, #tpu.memory_space<vmem>>, vector<8x19x32xbf16>
    %1 = vector.extract_strided_slice %0 {offsets = [0, 0, 0], sizes = [8, 16, 32], strides = [1, 1, 1]} : vector<8x19x32xbf16> to vector<8x16x32xbf16>
    %2 = vector.extract_strided_slice %0 {offsets = [0, 1, 0], sizes = [8, 16, 32], strides = [1, 1, 1]} : vector<8x19x32xbf16> to vector<8x16x32xbf16>
    %3 = vector.extract_strided_slice %0 {offsets = [0, 2, 0], sizes = [8, 16, 32], strides = [1, 1, 1]} : vector<8x19x32xbf16> to vector<8x16x32xbf16>
    %4 = vector.extract_strided_slice %0 {offsets = [0, 3, 0], sizes = [8, 16, 32], strides = [1, 1, 1]} : vector<8x19x32xbf16> to vector<8x16x32xbf16>
    %5 = tpu.concatenate %1, %2, %3, %4 in 2 : vector<8x16x32xbf16>, vector<8x16x32xbf16>, vector<8x16x32xbf16>, vector<8x16x32xbf16> -> vector<8x16x128xbf16>
    %6 = vector.shape_cast %5 : vector<8x16x128xbf16> to vector<128x128xbf16>
    %c0_2 = arith.constant 0 : index
    %c0_3 = arith.constant 0 : index
    %7 = vector.load %arg2[%c0_2, %c0_3] : memref<128x128xbf16, #tpu.memory_space<vmem>>, vector<128x128xbf16>
    %cst = arith.constant dense<0.000000e+00> : vector<128x128xf32>
    %8 = tpu.matmul %6, %7, %cst {dimension_numbers = #tpu.dot_dimension_numbers<[1], [0], [0], [1], [0, 0, 1, 1], [], []>} : vector<128x128xbf16>, vector<128x128xbf16>, vector<128x128xf32> -> vector<128x128xf32>
    %c0_4 = arith.constant 0 : index
    %c0_5 = arith.constant 0 : index
    %9 = vector.load %arg3[%c0_4, %c0_5] : memref<1x128xf32, #tpu.memory_space<vmem>>, vector<1x128xf32>
    %10 = vector.broadcast %9 : vector<1x128xf32> to vector<128x128xf32>
    %11 = arith.addf %8, %10 : vector<128x128xf32>
    %cst_6 = arith.constant 0.000000e+00 : f32
    %12 = vector.broadcast %cst_6 : f32 to vector<128x128xf32>
    %13 = arith.maximumf %11, %12 : vector<128x128xf32>
    %14 = vector.shape_cast %13 : vector<128x128xf32> to vector<8x16x128xf32>
    %15 = tpu.iota {dimensions = array<i32: 1>} : vector<8x16x128xi32>
    %c0_7 = arith.constant 0 : index
    %c0_8 = arith.constant 0 : index
    %16 = vector.load %arg4[%c0_7, %c0_8] : memref<1x128xi32, #tpu.memory_space<vmem>>, vector<1x128xi32>
    %17 = vector.shape_cast %16 : vector<1x128xi32> to vector<1x1x128xi32>
    %18 = vector.broadcast %17 : vector<1x1x128xi32> to vector<8x16x128xi32>
    %19 = arith.cmpi slt, %15, %18 : vector<8x16x128xi32>
    %cst_9 = arith.constant 0.000000e+00 : f32
    %20 = vector.broadcast %cst_9 : f32 to vector<8x16x128xf32>
    %21 = arith.select %19, %14, %20 : vector<8x16x128xi1>, vector<8x16x128xf32>
    %cst_10 = arith.constant dense<0xFF800000> : vector<8x128xf32>
    %22 = vector.multi_reduction <maximumf>, %21, %cst_10 [1] : vector<8x16x128xf32> to vector<8x128xf32>
    %c0_11 = arith.constant 0 : index
    %c0_12 = arith.constant 0 : index
    %23 = vector.load %arg5[%c0_11, %c0_12] : memref<128x128xf32, #tpu.memory_space<vmem>>, vector<128x128xf32>
    %cst_13 = arith.constant dense<0.000000e+00> : vector<8x128xf32>
    %24 = tpu.matmul %22, %23, %cst_13 {dimension_numbers = #tpu.dot_dimension_numbers<[1], [0], [0], [1], [0, 0, 1, 1], [], []>} : vector<8x128xf32>, vector<128x128xf32>, vector<8x128xf32> -> vector<8x128xf32>
    %c0_14 = arith.constant 0 : index
    %c0_15 = arith.constant 0 : index
    %25 = vector.load %arg6[%c0_14, %c0_15] : memref<1x128xf32, #tpu.memory_space<vmem>>, vector<1x128xf32>
    %26 = vector.broadcast %25 : vector<1x128xf32> to vector<8x128xf32>
    %27 = arith.addf %24, %26 : vector<8x128xf32>
    %c0_16 = arith.constant 0 : index
    %c0_17 = arith.constant 0 : index
    %28 = vector.load %arg7[%c0_16, %c0_17] : memref<8x128xf32, #tpu.memory_space<vmem>>, vector<8x128xf32>
    tpu.vector_store %arg7[%c0_16, %c0_17], %27 {strides = array<i32>} : memref<8x128xf32, #tpu.memory_space<vmem>>, vector<8x128xf32>,
    return
  }
  func.func @transform_0(%arg0: i32) -> (i32, i32, i32) {
    %c0_i32 = arith.constant 0 : i32
    %c0_i32_0 = arith.constant 0 : i32
    %c0_i32_1 = arith.constant 0 : i32
    return %arg0, %c0_i32, %c0_i32_0 : i32, i32, i32
  }
  func.func @transform_1(%arg0: i32) -> (i32, i32) {
    %c0_i32 = arith.constant 0 : i32
    %c0_i32_0 = arith.constant 0 : i32
    %c0_i32_1 = arith.constant 0 : i32
    return %c0_i32, %c0_i32_0 : i32, i32
  }
  func.func @transform_2(%arg0: i32) -> (i32, i32) {
    %c0_i32 = arith.constant 0 : i32
    %c0_i32_0 = arith.constant 0 : i32
    %c0_i32_1 = arith.constant 0 : i32
    return %c0_i32, %c0_i32_0 : i32, i32
  }
  func.func @transform_3(%arg0: i32) -> (i32, i32) {
    %c0_i32 = arith.constant 0 : i32
    %c0_i32_0 = arith.constant 0 : i32
    %c0_i32_1 = arith.constant 0 : i32
    return %c0_i32, %c0_i32_0 : i32, i32
  }
  func.func @transform_4(%arg0: i32) -> (i32, i32) {
    %c0_i32 = arith.constant 0 : i32
    %c0_i32_0 = arith.constant 0 : i32
    %c0_i32_1 = arith.constant 0 : i32
    return %c0_i32, %c0_i32_0 : i32, i32
  }
  func.func @transform_5(%arg0: i32) -> (i32, i32) {
    %c0_i32 = arith.constant 0 : i32
    %c0_i32_0 = arith.constant 0 : i32
    %c0_i32_1 = arith.constant 0 : i32
    return %c0_i32, %c0_i32_0 : i32, i32
  }
  func.func @transform_6(%arg0: i32) -> (i32, i32) {
    %c0_i32 = arith.constant 0 : i32
    %c0_i32_0 = arith.constant 0 : i32
    return %arg0, %c0_i32 : i32, i32
  }
}

</mosaic_0001>

<llo_original>
// kernel: tpu_custom_call.1
$region0: #{tpu_custom_call.1}
  #allocation0 [shape = 'u32[]', space=smem, size = 0x4, offset = 0x4, fixed_abs, tag = 'smem constant byte address 0x4 - core index']
  #allocation1 [shape = 'u32[144,128]{1,0:T(1,128)}', space=vmem, size = 0x12000, scoped, tag = 'internal scratch']
  %s0 = inlined_call_operand.vmem [shape: bf16[8,19,32], index: 0, kind: input, shape index: {}]
  %s1 = inlined_call_operand.hbm [shape: bf16[128,128], index: 1, kind: input, shape index: {}]
  %s2 = inlined_call_operand.vmem [shape: f32[1,128], index: 2, kind: input, shape index: {}]
  %s3 = inlined_call_operand.vmem [shape: s32[1,128], index: 3, kind: input, shape index: {}]
  %s4 = inlined_call_operand.vmem [shape: f32[128,128], index: 4, kind: input, shape index: {}]
  %s5 = inlined_call_operand.vmem [shape: f32[1,128], index: 5, kind: input, shape index: {}]
  %s6 = inlined_call_operand.hbm [shape: f32[8,128], index: 6, kind: output, shape index: {}]
  %s7 = sld [smem:[#allocation0]]
  $region38: #{tpu_custom_call.1} parent=0
    _
  %s9 = ssub.s32 1, %s7
  %s10 = scalar_select 0, %s9, %s7
  $region1: #{tpu_custom_call.1} parent=0
    #allocation2 [shape = 'u8[32768]{0}', space=vmem, size = 0x8000, scoped, tag = 'input window, operand 1, single buffered']
    #allocation3 [shape = 's32[1]{0}', space=sflag, size = 0x4, scoped, tag = 'scoped memory for tpu_custom_call.1']
    #allocation4 [shape = 's32[1]{0}', space=sflag, size = 0x4, scoped, tag = 'scoped memory for tpu_custom_call.1']
    #allocation5 [shape = 'u8[4096]{0}', space=vmem, size = 0x1000, scoped, tag = 'output window, operand 0, single buffered']
    %11 = vsyncpa [#allocation3], 0
    %12 = vsyncpa [#allocation4], 0
    // Predicated region
    $region2: #{tpu_custom_call.1} parent=1 // pred_check
      _
    $region3: #{tpu_custom_call.1} parent=1 // pred_check_branch
      %14 = sbr.rel (0) target = $region5
    $region4: #{tpu_custom_call.1} parent=1 // pred_region
      _
    $region5: #{tpu_custom_call.1} parent=1 // pred_fallthru
      _
    // Predicated region
    $region6: #{tpu_custom_call.1} parent=1 // pred_check
      _
    $region7: #{tpu_custom_call.1} parent=1 // pred_check_branch
      %16 = sbr.rel (0) target = $region9
    $region8: #{tpu_custom_call.1} parent=1 // pred_region
      %s18 = ssub.s32 1024, 1024
      %19 = vsyncadd [#allocation3], %s18
      %s20 = sshll.u32 [#allocation2], 4
      %s21 = int_to_ptr.vmem [resolvable:$true] %s20
      %26 = dma.hbm_to_vmem [thread:$0]  %s1, 1024, %s21, [#allocation3], 64, 64, 4
    $region9: #{tpu_custom_call.1} parent=1 // pred_fallthru
      _
    // Predicated region
    $region10: #{tpu_custom_call.1} parent=1 // pred_check
      _
    $region11: #{tpu_custom_call.1} parent=1 // pred_check_branch
      %28 = sbr.rel (0) target = $region13
    $region12: #{tpu_custom_call.1} parent=1 // pred_region
      _
    $region13: #{tpu_custom_call.1} parent=1 // pred_fallthru
      _
    // Predicated region
    $region14: #{tpu_custom_call.1} parent=1 // pred_check
      _
    $region15: #{tpu_custom_call.1} parent=1 // pred_check_branch
      %30 = sbr.rel (0) target = $region17
    $region16: #{tpu_custom_call.1} parent=1 // pred_region
      _
    $region17: #{tpu_custom_call.1} parent=1 // pred_fallthru
      _
    // Predicated region
    $region18: #{tpu_custom_call.1} parent=1 // pred_check
      _
    $region19: #{tpu_custom_call.1} parent=1 // pred_check_branch
      %32 = sbr.rel (0) target = $region21
    $region20: #{tpu_custom_call.1} parent=1 // pred_region
      _
    $region21: #{tpu_custom_call.1} parent=1 // pred_fallthru
      _
    // Predicated region
    $region22: #{tpu_custom_call.1} parent=1 // pred_check
      _
    $region23: #{tpu_custom_call.1} parent=1 // pred_check_branch
      %34 = sbr.rel (0) target = $region25
    $region24: #{tpu_custom_call.1} parent=1 // pred_region
      _
    $region25: #{tpu_custom_call.1} parent=1 // pred_fallthru
      _
    // Predicated region
    $region26: #{tpu_custom_call.1} parent=1 // pred_check
      _
    $region27: #{tpu_custom_call.1} parent=1 // pred_check_branch
      %36 = sbr.rel (0) target = $region29
    $region28: #{tpu_custom_call.1} parent=1 // pred_region
      %37 = dma.done [#allocation3], 1024
    $region29: #{tpu_custom_call.1} parent=1 // pred_fallthru
      _
    %v39 = vld [vmem:[%s0] sm:$0xf]
    %v40 = vld [vmem:[%s0 + $0x4] sm:$0xf]
    %v41 = vld [vmem:[%s0 + $0x8] sm:$0x3]
    %v42 = vld [vmem:[%s0 + $0xc] sm:$0xf]
    %v43 = vld [vmem:[%s0 + $0x10] sm:$0xf]
    %v44 = vld [vmem:[%s0 + $0x14] sm:$0x3]
    %v45 = vld [vmem:[%s0 + $0x18] sm:$0xf]
    %v46 = vld [vmem:[%s0 + $0x1c] sm:$0xf]
    %v47 = vld [vmem:[%s0 + $0x20] sm:$0x3]
    %v48 = vld [vmem:[%s0 + $0x24] sm:$0xf]
    %v49 = vld [vmem:[%s0 + $0x28] sm:$0xf]
    %v50 = vld [vmem:[%s0 + $0x2c] sm:$0x3]
    %v51 = vld [vmem:[%s0 + $0x30] sm:$0xf]
    %v52 = vld [vmem:[%s0 + $0x34] sm:$0xf]
    %v53 = vld [vmem:[%s0 + $0x38] sm:$0x3]
    %v54 = vld [vmem:[%s0 + $0x3c] sm:$0xf]
    %v55 = vld [vmem:[%s0 + $0x40] sm:$0xf]
    %v56 = vld [vmem:[%s0 + $0x44] sm:$0x3]
    %v57 = vld [vmem:[%s0 + $0x48] sm:$0xf]
    %v58 = vld [vmem:[%s0 + $0x4c] sm:$0xf]
    %v59 = vld [vmem:[%s0 + $0x50] sm:$0x3]
    %v60 = vld [vmem:[%s0 + $0x54] sm:$0xf]
    %v61 = vld [vmem:[%s0 + $0x58] sm:$0xf]
    %v62 = vld [vmem:[%s0 + $0x5c] sm:$0x3]
    %v79 = vunpack.c.l.b16 %v39
    %v80 = vunpack.c.l.b16 %v40
    %v81 = vunpack.c.l.b16 %v42
    %v82 = vunpack.c.l.b16 %v43
    %v83 = vunpack.c.l.b16 %v45
    %v84 = vunpack.c.l.b16 %v46
    %v85 = vunpack.c.l.b16 %v48
    %v86 = vunpack.c.l.b16 %v49
    %v87 = vunpack.c.l.b16 %v51
    %v88 = vunpack.c.l.b16 %v52
    %v89 = vunpack.c.l.b16 %v54
    %v90 = vunpack.c.l.b16 %v55
    %v91 = vunpack.c.l.b16 %v57
    %v92 = vunpack.c.l.b16 %v58
    %v93 = vunpack.c.l.b16 %v60
    %v94 = vunpack.c.l.b16 %v61
    %v95 = vpack.c.b16 %v80, %v79
    %v96 = vpack.c.b16 %v82, %v81
    %v97 = vpack.c.b16 %v84, %v83
    %v98 = vpack.c.b16 %v86, %v85
    %v99 = vpack.c.b16 %v88, %v87
    %v100 = vpack.c.b16 %v90, %v89
    %v101 = vpack.c.b16 %v92, %v91
    %v102 = vpack.c.b16 %v94, %v93
    %v111 = vunpack.c.l.b16 %v41
    %v112 = vunpack.c.l.b16 %v44
    %v113 = vunpack.c.l.b16 %v47
    %v114 = vunpack.c.l.b16 %v50
    %v115 = vunpack.c.l.b16 %v53
    %v116 = vunpack.c.l.b16 %v56
    %v117 = vunpack.c.l.b16 %v59
    %v118 = vunpack.c.l.b16 %v62
    %v119 = vpack.c.b16 %v111, %v111
    %v120 = vpack.c.b16 %v112, %v112
    %v121 = vpack.c.b16 %v113, %v113
    %v122 = vpack.c.b16 %v114, %v114
    %v123 = vpack.c.b16 %v115, %v115
    %v124 = vpack.c.b16 %v116, %v116
    %v125 = vpack.c.b16 %v117, %v117
    %v126 = vpack.c.b16 %v118, %v118
    %vm127 = vsmask.f32 7424
    %v129 = vshrl.u32 %v95, 16
    %v131 = vshll.u32 %v95, 16
    %v133 = vrot.slane %v131, 1
    %v134 = vor.u32 %v129, %v133
    %v136 = vshll.u32 %v119, 16
    %v138 = vrot.slane %v136, 1
    %v139 = vsel %vm127, %v134, %v138
    %v141 = vshrl.u32 %v96, 16
    %v143 = vshll.u32 %v96, 16
    %v145 = vrot.slane %v143, 1
    %v146 = vor.u32 %v141, %v145
    %v148 = vshll.u32 %v120, 16
    %v150 = vrot.slane %v148, 1
    %v151 = vsel %vm127, %v146, %v150
    %v153 = vshrl.u32 %v97, 16
    %v155 = vshll.u32 %v97, 16
    %v157 = vrot.slane %v155, 1
    %v158 = vor.u32 %v153, %v157
    %v160 = vshll.u32 %v121, 16
    %v162 = vrot.slane %v160, 1
    %v163 = vsel %vm127, %v158, %v162
    %v165 = vshrl.u32 %v98, 16
    %v167 = vshll.u32 %v98, 16
    %v169 = vrot.slane %v167, 1
    %v170 = vor.u32 %v165, %v169
    %v172 = vshll.u32 %v122, 16
    %v174 = vrot.slane %v172, 1
    %v175 = vsel %vm127, %v170, %v174
    %v177 = vshrl.u32 %v99, 16
    %v179 = vshll.u32 %v99, 16
    %v181 = vrot.slane %v179, 1
    %v182 = vor.u32 %v177, %v181
    %v184 = vshll.u32 %v123, 16
    %v186 = vrot.slane %v184, 1
    %v187 = vsel %vm127, %v182, %v186
    %v189 = vshrl.u32 %v100, 16
    %v191 = vshll.u32 %v100, 16
    %v193 = vrot.slane %v191, 1
    %v194 = vor.u32 %v189, %v193
    %v196 = vshll.u32 %v124, 16
    %v198 = vrot.slane %v196, 1
    %v199 = vsel %vm127, %v194, %v198
    %v201 = vshrl.u32 %v101, 16
    %v203 = vshll.u32 %v101, 16
    %v205 = vrot.slane %v203, 1
    %v206 = vor.u32 %v201, %v205
    %v208 = vshll.u32 %v125, 16
    %v210 = vrot.slane %v208, 1
    %v211 = vsel %vm127, %v206, %v210
    %v213 = vshrl.u32 %v102, 16
    %v215 = vshll.u32 %v102, 16
    %v217 = vrot.slane %v215, 1
    %v218 = vor.u32 %v213, %v217
    %v220 = vshll.u32 %v126, 16
    %v222 = vrot.slane %v220, 1
    %v223 = vsel %vm127, %v218, %v222
    %224 = vrot.lane.b32.xlu0 %v139, 32
    %v225 = vpop.permute.xlu0 %224
    %226 = vrot.lane.b32.xlu0 %v151, 32
    %v227 = vpop.permute.xlu0 %226
    %228 = vrot.lane.b32.xlu0 %v163, 32
    %v229 = vpop.permute.xlu0 %228
    %230 = vrot.lane.b32.xlu0 %v175, 32
    %v231 = vpop.permute.xlu0 %230
    %232 = vrot.lane.b32.xlu0 %v187, 32
    %v233 = vpop.permute.xlu0 %232
    %234 = vrot.lane.b32.xlu0 %v199, 32
    %v235 = vpop.permute.xlu0 %234
    %236 = vrot.lane.b32.xlu0 %v211, 32
    %v237 = vpop.permute.xlu0 %236
    %238 = vrot.lane.b32.xlu0 %v223, 32
    %v239 = vpop.permute.xlu0 %238
    %vm240 = vcmask 1046528
    %v241 = vrot.slane %v95, 1
    %v242 = vrot.slane %v119, 1
    %v243 = vsel %vm240, %v241, %v242
    %v244 = vrot.slane %v96, 1
    %v245 = vrot.slane %v120, 1
    %v246 = vsel %vm240, %v244, %v245
    %v247 = vrot.slane %v97, 1
    %v248 = vrot.slane %v121, 1
    %v249 = vsel %vm240, %v247, %v248
    %v250 = vrot.slane %v98, 1
    %v251 = vrot.slane %v122, 1
    %v252 = vsel %vm240, %v250, %v251
    %v253 = vrot.slane %v99, 1
    %v254 = vrot.slane %v123, 1
    %v255 = vsel %vm240, %v253, %v254
    %v256 = vrot.slane %v100, 1
    %v257 = vrot.slane %v124, 1
    %v258 = vsel %vm240, %v256, %v257
    %v259 = vrot.slane %v101, 1
    %v260 = vrot.slane %v125, 1
    %v261 = vsel %vm240, %v259, %v260
    %v262 = vrot.slane %v102, 1
    %v263 = vrot.slane %v126, 1
    %v264 = vsel %vm240, %v262, %v263
    %265 = vrot.lane.b32.xlu0 %v243, 64
    %v266 = vpop.permute.xlu0 %265
    %267 = vrot.lane.b32.xlu0 %v246, 64
    %v268 = vpop.permute.xlu0 %267
    %269 = vrot.lane.b32.xlu0 %v249, 64
    %v270 = vpop.permute.xlu0 %269
    %271 = vrot.lane.b32.xlu0 %v252, 64
    %v272 = vpop.permute.xlu0 %271
    %273 = vrot.lane.b32.xlu0 %v255, 64
    %v274 = vpop.permute.xlu0 %273
    %275 = vrot.lane.b32.xlu0 %v258, 64
    %v276 = vpop.permute.xlu0 %275
    %277 = vrot.lane.b32.xlu0 %v261, 64
    %v278 = vpop.permute.xlu0 %277
    %279 = vrot.lane.b32.xlu0 %v264, 64
    %v280 = vpop.permute.xlu0 %279
    %vm281 = vsmask.f32 6400
    %v282 = vrot.slane %v129, 1
    %v283 = vrot.slane %v131, 2
    %v284 = vor.u32 %v282, %v283
    %v285 = vshrl.u32 %v119, 16
    %v287 = vrot.slane %v285, 1
    %v288 = vrot.slane %v136, 2
    %v289 = vor.u32 %v287, %v288
    %v290 = vsel %vm281, %v284, %v289
    %v291 = vrot.slane %v141, 1
    %v292 = vrot.slane %v143, 2
    %v293 = vor.u32 %v291, %v292
    %v294 = vshrl.u32 %v120, 16
    %v296 = vrot.slane %v294, 1
    %v297 = vrot.slane %v148, 2
    %v298 = vor.u32 %v296, %v297
    %v299 = vsel %vm281, %v293, %v298
    %v300 = vrot.slane %v153, 1
    %v301 = vrot.slane %v155, 2
    %v302 = vor.u32 %v300, %v301
    %v303 = vshrl.u32 %v121, 16
    %v305 = vrot.slane %v303, 1
    %v306 = vrot.slane %v160, 2
    %v307 = vor.u32 %v305, %v306
    %v308 = vsel %vm281, %v302, %v307
    %v309 = vrot.slane %v165, 1
    %v310 = vrot.slane %v167, 2
    %v311 = vor.u32 %v309, %v310
    %v312 = vshrl.u32 %v122, 16
    %v314 = vrot.slane %v312, 1
    %v315 = vrot.slane %v172, 2
    %v316 = vor.u32 %v314, %v315
    %v317 = vsel %vm281, %v311, %v316
    %v318 = vrot.slane %v177, 1
    %v319 = vrot.slane %v179, 2
    %v320 = vor.u32 %v318, %v319
    %v321 = vshrl.u32 %v123, 16
    %v323 = vrot.slane %v321, 1
    %v324 = vrot.slane %v184, 2
    %v325 = vor.u32 %v323, %v324
    %v326 = vsel %vm281, %v320, %v325
    %v327 = vrot.slane %v189, 1
    %v328 = vrot.slane %v191, 2
    %v329 = vor.u32 %v327, %v328
    %v330 = vshrl.u32 %v124, 16
    %v332 = vrot.slane %v330, 1
    %v333 = vrot.slane %v196, 2
    %v334 = vor.u32 %v332, %v333
    %v335 = vsel %vm281, %v329, %v334
    %v336 = vrot.slane %v201, 1
    %v337 = vrot.slane %v203, 2
    %v338 = vor.u32 %v336, %v337
    %v339 = vshrl.u32 %v125, 16
    %v341 = vrot.slane %v339, 1
    %v342 = vrot.slane %v208, 2
    %v343 = vor.u32 %v341, %v342
    %v344 = vsel %vm281, %v338, %v343
    %v345 = vrot.slane %v213, 1
    %v346 = vrot.slane %v215, 2
    %v347 = vor.u32 %v345, %v346
    %v348 = vshrl.u32 %v126, 16
    %v350 = vrot.slane %v348, 1
    %v351 = vrot.slane %v220, 2
    %v352 = vor.u32 %v350, %v351
    %v353 = vsel %vm281, %v347, %v352
    %354 = vrot.lane.b32.xlu0 %v290, 96
    %v355 = vpop.permute.xlu0 %354
    %356 = vrot.lane.b32.xlu0 %v299, 96
    %v357 = vpop.permute.xlu0 %356
    %358 = vrot.lane.b32.xlu0 %v308, 96
    %v359 = vpop.permute.xlu0 %358
    %360 = vrot.lane.b32.xlu0 %v317, 96
    %v361 = vpop.permute.xlu0 %360
    %362 = vrot.lane.b32.xlu0 %v326, 96
    %v363 = vpop.permute.xlu0 %362
    %364 = vrot.lane.b32.xlu0 %v335, 96
    %v365 = vpop.permute.xlu0 %364
    %366 = vrot.lane.b32.xlu0 %v344, 96
    %v367 = vpop.permute.xlu0 %366
    %368 = vrot.lane.b32.xlu0 %v353, 96
    %v369 = vpop.permute.xlu0 %368
    %vm370 = vcmask 261120
    %v372 = vsel %vm370, %v95, %v225
    %v374 = vsel %vm370, %v96, %v227
    %v376 = vsel %vm370, %v97, %v229
    %v378 = vsel %vm370, %v98, %v231
    %v380 = vsel %vm370, %v99, %v233
    %v382 = vsel %vm370, %v100, %v235
    %v384 = vsel %vm370, %v101, %v237
    %v386 = vsel %vm370, %v102, %v239
    %vm387 = vcmask 523264
    %v389 = vsel %vm387, %v372, %v266
    %v391 = vsel %vm387, %v374, %v268
    %v393 = vsel %vm387, %v376, %v270
    %v395 = vsel %vm387, %v378, %v272
    %v397 = vsel %vm387, %v380, %v274
    %v399 = vsel %vm387, %v382, %v276
    %v401 = vsel %vm387, %v384, %v278
    %v403 = vsel %vm387, %v386, %v280
    %vm404 = vcmask 785408
    %v406 = vsel %vm404, %v389, %v355
    %v409 = vsel %vm404, %v391, %v357
    %v412 = vsel %vm404, %v393, %v359
    %v415 = vsel %vm404, %v395, %v361
    %v418 = vsel %vm404, %v397, %v363
    %v421 = vsel %vm404, %v399, %v365
    %v424 = vsel %vm404, %v401, %v367
    %v427 = vsel %vm404, %v403, %v369
    %v429 = vld [vmem:[#allocation2] sm:$0xf]
    %v430 = vld [vmem:[#allocation2 + $0x4] sm:$0xf]
    %v431 = vld [vmem:[#allocation2 + $0x8] sm:$0xf]
    %v432 = vld [vmem:[#allocation2 + $0xc] sm:$0xf]
    %v433 = vld [vmem:[#allocation2 + $0x10] sm:$0xf]
    %v434 = vld [vmem:[#allocation2 + $0x14] sm:$0xf]
    %v435 = vld [vmem:[#allocation2 + $0x18] sm:$0xf]
    %v436 = vld [vmem:[#allocation2 + $0x1c] sm:$0xf]
    %v437 = vld [vmem:[#allocation2 + $0x20] sm:$0xf]
    %v438 = vld [vmem:[#allocation2 + $0x24] sm:$0xf]
    %v439 = vld [vmem:[#allocation2 + $0x28] sm:$0xf]
    %v440 = vld [vmem:[#allocation2 + $0x2c] sm:$0xf]
    %v441 = vld [vmem:[#allocation2 + $0x30] sm:$0xf]
    %v442 = vld [vmem:[#allocation2 + $0x34] sm:$0xf]
    %v443 = vld [vmem:[#allocation2 + $0x38] sm:$0xf]
    %v444 = vld [vmem:[#allocation2 + $0x3c] sm:$0xf]
    %v445 = vld [vmem:[%s2] sm:$0x1]
    %v447 = vlaneseq
    %v448 = vshrl.u32 %v447, 7
    %v449 = vsub.s32 0, %v448
    %v450 = vrot.slane %v445, %v449
    %v468 = vunpack.c.l.b16 %v429
    %v469 = vunpack.c.l.b16 %v430
    %v470 = vunpack.c.l.b16 %v431
    %v471 = vunpack.c.l.b16 %v432
    %v472 = vunpack.c.l.b16 %v433
    %v473 = vunpack.c.l.b16 %v434
    %v474 = vunpack.c.l.b16 %v435
    %v475 = vunpack.c.l.b16 %v436
    %v476 = vunpack.c.l.b16 %v437
    %v477 = vunpack.c.l.b16 %v438
    %v478 = vunpack.c.l.b16 %v439
    %v479 = vunpack.c.l.b16 %v440
    %v480 = vunpack.c.l.b16 %v441
    %v481 = vunpack.c.l.b16 %v442
    %v482 = vunpack.c.l.b16 %v443
    %v483 = vunpack.c.l.b16 %v444
    %v484 = vpack.c.b16 %v469, %v468
    %v485 = vpack.c.b16 %v471, %v470
    %v486 = vpack.c.b16 %v473, %v472
    %v487 = vpack.c.b16 %v475, %v474
    %v488 = vpack.c.b16 %v477, %v476
    %v489 = vpack.c.b16 %v479, %v478
    %v490 = vpack.c.b16 %v481, %v480
    %v491 = vpack.c.b16 %v483, %v482
    %500 = vmatprep.subr.bf16.mxu0 0
    %501 = vmatpush1.bf16.msra.mxu0 %v484
    %502 = vmatprep.subr.bf16.mxu0 0
    %503 = vmatpush1.bf16.msra.mxu0 %v485
    %504 = vmatprep.subr.bf16.mxu0 0
    %505 = vmatpush1.bf16.msra.mxu0 %v486
    %506 = vmatprep.subr.bf16.mxu0 0
    %507 = vmatpush1.bf16.msra.mxu0 %v487
    %508 = vmatprep.subr.bf16.mxu0 0
    %509 = vmatpush1.bf16.msra.mxu0 %v488
    %510 = vmatprep.subr.bf16.mxu0 0
    %511 = vmatpush1.bf16.msra.mxu0 %v489
    %512 = vmatprep.subr.bf16.mxu0 0
    %513 = vmatpush1.bf16.msra.mxu0 %v490
    %514 = vmatprep.subr.bf16.mxu0 0
    %515 = vmatpush1.bf16.msra.mxu0 %v491
    %516 = vmatprep.subr.bf16.mxu0 0
    %517 = vmatpush1.bf16.msra.mxu0 0
    %518 = vmatprep.subr.bf16.mxu0 0
    %519 = vmatpush1.bf16.msra.mxu0 0
    %520 = vmatprep.subr.bf16.mxu0 0
    %521 = vmatpush1.bf16.msra.mxu0 0
    %522 = vmatprep.subr.bf16.mxu0 0
    %523 = vmatpush1.bf16.msra.mxu0 0
    %524 = vmatprep.subr.bf16.mxu0 0
    %525 = vmatpush1.bf16.msra.mxu0 0
    %526 = vmatprep.subr.bf16.mxu0 0
    %527 = vmatpush1.bf16.msra.mxu0 0
    %528 = vmatprep.subr.bf16.mxu0 0
    %529 = vmatpush1.bf16.msra.mxu0 0
    %530 = vmatprep.subr.bf16.mxu0 0
    %531 = vmatpush1.bf16.msra.mxu0 0
    %532 = vmatprep.mubr.bf16.mxu0 0
    %533 = vmatmul.mubr.bf16.gmra.mrb[0].mxu0 %v406
    %v534 = vpop.f32.mrb[0].mxu0
    %v535 = vadd.f32 %v450, %v534
    %v536 = vpop.f32.mrb[0].mxu0
    %v537 = vpop.f32.mrb[0].mxu0
    %v538 = vadd.f32 %v450, %v537
    %v539 = vpop.f32.mrb[0].mxu0
    %540 = vmatprep.mubr.bf16.mxu0 0
    %541 = vmatmul.mubr.bf16.gmra.mrb[0].mxu0 %v409
    %v542 = vpop.f32.mrb[0].mxu0
    %v543 = vadd.f32 %v450, %v542
    %v544 = vpop.f32.mrb[0].mxu0
    %v545 = vpop.f32.mrb[0].mxu0
    %v546 = vadd.f32 %v450, %v545
    %v547 = vpop.f32.mrb[0].mxu0
    %548 = vmatprep.mubr.bf16.mxu0 0
    %549 = vmatmul.mubr.bf16.gmra.mrb[0].mxu0 %v412
    %v550 = vpop.f32.mrb[0].mxu0
    %v551 = vadd.f32 %v450, %v550
    %v552 = vpop.f32.mrb[0].mxu0
    %v553 = vpop.f32.mrb[0].mxu0
    %v554 = vadd.f32 %v450, %v553
    %v555 = vpop.f32.mrb[0].mxu0
    %556 = vmatprep.mubr.bf16.mxu0 0
    %557 = vmatmul.mubr.bf16.gmra.mrb[0].mxu0 %v415
    %v558 = vpop.f32.mrb[0].mxu0
    %v559 = vadd.f32 %v450, %v558
    %v560 = vpop.f32.mrb[0].mxu0
    %v561 = vpop.f32.mrb[0].mxu0
    %v562 = vadd.f32 %v450, %v561
    %v563 = vpop.f32.mrb[0].mxu0
    %564 = vmatprep.mubr.bf16.mxu0 0
    %565 = vmatmul.mubr.bf16.gmra.mrb[0].mxu0 %v418
    %v566 = vpop.f32.mrb[0].mxu0
    %v567 = vadd.f32 %v450, %v566
    %v568 = vpop.f32.mrb[0].mxu0
    %v569 = vpop.f32.mrb[0].mxu0
    %v570 = vadd.f32 %v450, %v569
    %v571 = vpop.f32.mrb[0].mxu0
    %572 = vmatprep.mubr.bf16.mxu0 0
    %573 = vmatmul.mubr.bf16.gmra.mrb[0].mxu0 %v421
    %v574 = vpop.f32.mrb[0].mxu0
    %v575 = vadd.f32 %v450, %v574
    %v576 = vpop.f32.mrb[0].mxu0
    %v577 = vpop.f32.mrb[0].mxu0
    %v578 = vadd.f32 %v450, %v577
    %v579 = vpop.f32.mrb[0].mxu0
    %580 = vmatprep.mubr.bf16.mxu0 0
    %581 = vmatmul.mubr.bf16.gmra.mrb[0].mxu0 %v424
    %v582 = vpop.f32.mrb[0].mxu0
    %v583 = vadd.f32 %v450, %v582
    %v584 = vpop.f32.mrb[0].mxu0
    %v585 = vpop.f32.mrb[0].mxu0
    %v586 = vadd.f32 %v450, %v585
    %v587 = vpop.f32.mrb[0].mxu0
    %588 = vmatprep.mubr.bf16.mxu0 0
    %589 = vmatmul.mubr.bf16.gmra.mrb[0].mxu0 %v427
    %v590 = vpop.f32.mrb[0].mxu0
    %v591 = vadd.f32 %v450, %v590
    %v592 = vpop.f32.mrb[0].mxu0
    %v593 = vpop.f32.mrb[0].mxu0
    %v594 = vadd.f32 %v450, %v593
    %v595 = vpop.f32.mrb[0].mxu0
    %596 = vdwg.mxu0
    %v597 = vmax.f32 %v535, 0.0
    %v598 = vmax.f32 %v538, 0.0
    %v599 = vmax.f32 %v543, 0.0
    %v600 = vmax.f32 %v546, 0.0
    %v601 = vmax.f32 %v551, 0.0
    %v602 = vmax.f32 %v554, 0.0
    %v603 = vmax.f32 %v559, 0.0
    %v604 = vmax.f32 %v562, 0.0
    %v605 = vmax.f32 %v567, 0.0
    %v606 = vmax.f32 %v570, 0.0
    %v607 = vmax.f32 %v575, 0.0
    %v608 = vmax.f32 %v578, 0.0
    %v609 = vmax.f32 %v583, 0.0
    %v610 = vmax.f32 %v586, 0.0
    %v611 = vmax.f32 %v591, 0.0
    %v612 = vmax.f32 %v594, 0.0
    %v613 = vlaneseq
    %v614 = vshrl.u32 %v613, 7
    %v615 = vadd.s32 %v614, 8
    %v616 = vld [vmem:[%s3] sm:$0x1]
    %v617 = vlaneseq
    %v618 = vshrl.u32 %v617, 7
    %v619 = vsub.s32 0, %v618
    %v620 = vrot.slane %v616, %v619
    %vm621 = vcmp.lt.s32.totalorder %v614, %v620
    %vm622 = vcmp.lt.s32.totalorder %v615, %v620
    %v623 = vsel %vm621, %v597, 0.0
    %v624 = vsel %vm622, %v598, 0.0
    %v625 = vsel %vm621, %v599, 0.0
    %v626 = vsel %vm622, %v600, 0.0
    %v627 = vsel %vm621, %v601, 0.0
    %v628 = vsel %vm622, %v602, 0.0
    %v629 = vsel %vm621, %v603, 0.0
    %v630 = vsel %vm622, %v604, 0.0
    %v631 = vsel %vm621, %v605, 0.0
    %v632 = vsel %vm622, %v606, 0.0
    %v633 = vsel %vm621, %v607, 0.0
    %v634 = vsel %vm622, %v608, 0.0
    %v635 = vsel %vm621, %v609, 0.0
    %v636 = vsel %vm622, %v610, 0.0
    %v637 = vsel %vm621, %v611, 0.0
    %v638 = vsel %vm622, %v612, 0.0
    %v639 = vmax.f32 %v623, %v624
    %v640 = vrot.slane %v639, 4
    %v641 = vmax.f32 %v639, %v640
    %v642 = vrot.slane %v641, 2
    %v643 = vmax.f32 %v641, %v642
    %v644 = vrot.slane %v643, 1
    %v645 = vmax.f32 %v643, %v644
    %v646 = vmax.f32 %v625, %v626
    %v647 = vrot.slane %v646, 4
    %v648 = vmax.f32 %v646, %v647
    %v649 = vrot.slane %v648, 2
    %v650 = vmax.f32 %v648, %v649
    %v651 = vrot.slane %v650, 1
    %v652 = vmax.f32 %v650, %v651
    %v653 = vmax.f32 %v627, %v628
    %v654 = vrot.slane %v653, 4
    %v655 = vmax.f32 %v653, %v654
    %v656 = vrot.slane %v655, 2
    %v657 = vmax.f32 %v655, %v656
    %v658 = vrot.slane %v657, 1
    %v659 = vmax.f32 %v657, %v658
    %v660 = vmax.f32 %v629, %v630
    %v661 = vrot.slane %v660, 4
    %v662 = vmax.f32 %v660, %v661
    %v663 = vrot.slane %v662, 2
    %v664 = vmax.f32 %v662, %v663
    %v665 = vrot.slane %v664, 1
    %v666 = vmax.f32 %v664, %v665
    %v667 = vmax.f32 %v631, %v632
    %v668 = vrot.slane %v667, 4
    %v669 = vmax.f32 %v667, %v668
    %v670 = vrot.slane %v669, 2
    %v671 = vmax.f32 %v669, %v670
    %v672 = vrot.slane %v671, 1
    %v673 = vmax.f32 %v671, %v672
    %v674 = vmax.f32 %v633, %v634
    %v675 = vrot.slane %v674, 4
    %v676 = vmax.f32 %v674, %v675
    %v677 = vrot.slane %v676, 2
    %v678 = vmax.f32 %v676, %v677
    %v679 = vrot.slane %v678, 1
    %v680 = vmax.f32 %v678, %v679
    %v681 = vmax.f32 %v635, %v636
    %v682 = vrot.slane %v681, 4
    %v683 = vmax.f32 %v681, %v682
    %v684 = vrot.slane %v683, 2
    %v685 = vmax.f32 %v683, %v684
    %v686 = vrot.slane %v685, 1
    %v687 = vmax.f32 %v685, %v686
    %v688 = vmax.f32 %v637, %v638
    %v689 = vrot.slane %v688, 4
    %v690 = vmax.f32 %v688, %v689
    %v691 = vrot.slane %v690, 2
    %v692 = vmax.f32 %v690, %v691
    %v693 = vrot.slane %v692, 1
    %v694 = vmax.f32 %v692, %v693
    %v695 = vld [vmem:[%s4] sm:$0xff]
    %v696 = vld [vmem:[%s4 + $0x8] sm:$0xff]
    %v697 = vld [vmem:[%s4 + $0x10] sm:$0xff]
    %v698 = vld [vmem:[%s4 + $0x18] sm:$0xff]
    %v699 = vld [vmem:[%s4 + $0x20] sm:$0xff]
    %v700 = vld [vmem:[%s4 + $0x28] sm:$0xff]
    %v701 = vld [vmem:[%s4 + $0x30] sm:$0xff]
    %v702 = vld [vmem:[%s4 + $0x38] sm:$0xff]
    %v703 = vld [vmem:[%s4 + $0x40] sm:$0xff]
    %v704 = vld [vmem:[%s4 + $0x48] sm:$0xff]
    %v705 = vld [vmem:[%s4 + $0x50] sm:$0xff]
    %v706 = vld [vmem:[%s4 + $0x58] sm:$0xff]
    %v707 = vld [vmem:[%s4 + $0x60] sm:$0xff]
    %v708 = vld [vmem:[%s4 + $0x68] sm:$0xff]
    %v709 = vld [vmem:[%s4 + $0x70] sm:$0xff]
    %v710 = vld [vmem:[%s4 + $0x78] sm:$0xff]
    %v711 = vld [vmem:[%s5] sm:$0x1]
    %v713 = vlaneseq
    %v714 = vshrl.u32 %v713, 7
    %v715 = vsub.s32 0, %v714
    %v716 = vrot.slane %v711, %v715
    %vm726 = vcmask 1041409
    %v727 = vsel %vm726, %v652, %v645
    %vm728 = vcmask 1042434
    %v729 = vsel %vm728, %v659, %v727
    %vm730 = vcmask 1043459
    %v731 = vsel %vm730, %v666, %v729
    %vm732 = vcmask 1044484
    %v733 = vsel %vm732, %v673, %v731
    %vm734 = vcmask 1045509
    %v735 = vsel %vm734, %v680, %v733
    %vm736 = vcmask 1046534
    %v737 = vsel %vm736, %v687, %v735
    %vm738 = vcmask 1047559
    %v739 = vsel %vm738, %v694, %v737
    %741 = vmatprep.subr.mxu0 0.0
    %742 = vmatpush1.msra.mxu0 %v695
    %743 = vmatprep.subr.mxu0 0.0
    %744 = vmatpush1.msra.mxu0 %v696
    %745 = vmatprep.subr.mxu0 0.0
    %746 = vmatpush1.msra.mxu0 %v697
    %747 = vmatprep.subr.mxu0 0.0
    %748 = vmatpush1.msra.mxu0 %v698
    %749 = vmatprep.subr.mxu0 0.0
    %750 = vmatpush1.msra.mxu0 %v699
    %751 = vmatprep.subr.mxu0 0.0
    %752 = vmatpush1.msra.mxu0 %v700
    %753 = vmatprep.subr.mxu0 0.0
    %754 = vmatpush1.msra.mxu0 %v701
    %755 = vmatprep.subr.mxu0 0.0
    %756 = vmatpush1.msra.mxu0 %v702
    %757 = vmatprep.subr.mxu0 0.0
    %758 = vmatpush1.msra.mxu0 %v703
    %759 = vmatprep.subr.mxu0 0.0
    %760 = vmatpush1.msra.mxu0 %v704
    %761 = vmatprep.subr.mxu0 0.0
    %762 = vmatpush1.msra.mxu0 %v705
    %763 = vmatprep.subr.mxu0 0.0
    %764 = vmatpush1.msra.mxu0 %v706
    %765 = vmatprep.subr.mxu0 0.0
    %766 = vmatpush1.msra.mxu0 %v707
    %767 = vmatprep.subr.mxu0 0.0
    %768 = vmatpush1.msra.mxu0 %v708
    %769 = vmatprep.subr.mxu0 0.0
    %770 = vmatpush1.msra.mxu0 %v709
    %771 = vmatprep.subr.mxu0 0.0
    %772 = vmatpush1.msra.mxu0 %v710
    %773 = vmatprep.subr.mxu0 0.0
    %774 = vmatpush1.msra.mxu0 0.0
    %775 = vmatprep.subr.mxu0 0.0
    %776 = vmatpush1.msra.mxu0 0.0
    %777 = vmatprep.subr.mxu0 0.0
    %778 = vmatpush1.msra.mxu0 0.0
    %779 = vmatprep.subr.mxu0 0.0
    %780 = vmatpush1.msra.mxu0 0.0
    %781 = vmatprep.subr.mxu0 0.0
    %782 = vmatpush1.msra.mxu0 0.0
    %783 = vmatprep.subr.mxu0 0.0
    %784 = vmatpush1.msra.mxu0 0.0
    %785 = vmatprep.subr.mxu0 0.0
    %786 = vmatpush1.msra.mxu0 0.0
    %787 = vmatprep.subr.mxu0 0.0
    %788 = vmatpush1.msra.mxu0 0.0
    %789 = vmatprep.subr.mxu0 0.0
    %790 = vmatpush1.msra.mxu0 0.0
    %791 = vmatprep.subr.mxu0 0.0
    %792 = vmatpush1.msra.mxu0 0.0
    %793 = vmatprep.subr.mxu0 0.0
    %794 = vmatpush1.msra.mxu0 0.0
    %795 = vmatprep.subr.mxu0 0.0
    %796 = vmatpush1.msra.mxu0 0.0
    %797 = vmatprep.subr.mxu0 0.0
    %798 = vmatpush1.msra.mxu0 0.0
    %799 = vmatprep.subr.mxu0 0.0
    %800 = vmatpush1.msra.mxu0 0.0
    %801 = vmatprep.subr.mxu0 0.0
    %802 = vmatpush1.msra.mxu0 0.0
    %803 = vmatprep.subr.mxu0 0.0
    %804 = vmatpush1.msra.mxu0 0.0
    %805 = vmatprep.mubr.f32.mxu0 0.0
    %806 = vmatmul.mubr.f32.gmra.mrb[0].mxu0 %v739
    %v807 = vpop.f32.mrb[0].mxu0
    %v808 = vadd.f32 %v716, %v807
    %v809 = vpop.f32.mrb[0].mxu0
    %810 = vdwg.mxu0
    %811 = vst [vmem:[#allocation5] sm:$0xff] %v808
    // Predicated region
    $region30: #{tpu_custom_call.1} parent=1 // pred_check
      _
    $region31: #{tpu_custom_call.1} parent=1 // pred_check_branch
      %813 = sbr.rel (0) target = $region33
    $region32: #{tpu_custom_call.1} parent=1 // pred_region
      %s815 = ssub.s32 128, 128
      %816 = vsyncadd [#allocation4], %s815
      %s818 = sshll.u32 [#allocation5], 4
      %s819 = int_to_ptr.vmem [resolvable:$true] %s818
      %821 = dma.vmem_to_hbm [thread:$0]  %s819, 128, %s6, [#allocation4]
    $region33: #{tpu_custom_call.1} parent=1 // pred_fallthru
      _
    // Predicated region
    $region34: #{tpu_custom_call.1} parent=1 // pred_check
      _
    $region35: #{tpu_custom_call.1} parent=1 // pred_check_branch
      %823 = sbr.rel (0) target = $region37
    $region36: #{tpu_custom_call.1} parent=1 // pred_region
      %824 = dma.done [#allocation4], 128
    $region37: #{tpu_custom_call.1} parent=1 // pred_fallthru
      _
    %825 = vsyncpa [#allocation3], 1
    %826 = vsyncpa [#allocation4], 1

</llo_original>
